<compile_context>
chip_gen: v6e
topology: v6e:2x2x1
jax: 0.10.0
libtpu: 0.0.40
codegen_flags: <defaults>
</compile_context>

<pallas_src>
import jax
import jax.numpy as jnp
from jax.experimental import pallas as pl
from jax.experimental.pallas import tpu as pltpu


def _round_up(x, m):
    return ((x + m - 1) // m) * m


def _decoder_kernel(x_ref, wc_ref, b1_ref, w2t_ref, b2_ref, o_ref):
    d_out = o_ref.shape[-1]  # static at trace time
    # Folded first layer: x @ (|W_mix|^T W1^T) + b1, f32 accumulation on the MXU.
    h = jnp.dot(x_ref[...], wc_ref[...],
                preferred_element_type=jnp.float32) + b1_ref[...]
    # LeakyReLU(0.01) in f32 on the VPU.
    h = jnp.where(h > 0, h, 0.01 * h)
    # Second layer: h @ W2^T + b2 (weights pre-transposed, f32 accumulation).
    out = jnp.dot(h.astype(w2t_ref.dtype), w2t_ref[...],
                  preferred_element_type=jnp.float32) + b2_ref[...]
    # Only the first d_out lanes are valid; store just those (HBM write bytes
    # are the binding resource for this memory-bound kernel).
    o_ref[...] = out[:, :d_out].astype(o_ref.dtype)


def prepare_decoder_weights(w_mix, w1, b1, w2, b2,
                            compute_dtype=jnp.bfloat16):
    """One-time folding / layout prep. Call once per weight set, not per forward.

    Exact algebraic fold (no nonlinearity between mixture and first MLP layer):
        x @ |W_mix|^T @ W1^T == x @ (|W_mix|^T @ W1^T)
    """
    D = w_mix.shape[0]
    wc = jnp.abs(w_mix).astype(jnp.float32).T @ w1.astype(jnp.float32).T  # (L, D)
    w2t = w2.astype(jnp.float32).T                                        # (D, D)

    # Lane-dense compute width inside the kernel (padded lanes are exactly 0
    # through bias + LeakyReLU, so numerics are unaffected).
    Dp = _round_up(D, 128)
    wc = jnp.pad(wc, ((0, 0), (0, Dp - D))).astype(compute_dtype)
    w2t = jnp.pad(w2t, ((0, Dp - D), (0, Dp - D))).astype(compute_dtype)
    b1p = jnp.pad(b1.astype(jnp.float32), (0, Dp - D)).reshape(1, Dp)
    b2p = jnp.pad(b2.astype(jnp.float32), (0, Dp - D)).reshape(1, Dp)
    return {"wc": wc, "b1": b1p, "w2t": w2t, "b2": b2p,
            "observed_dim": D, "compute_dtype": compute_dtype}


def decoder_forward(x, prepared, *, batch_tile=2048):
    """x: (N, latent_dim) -> (N, observed_dim) using prepared (folded) weights."""
    N, L = x.shape
    D = prepared["observed_dim"]
    wc, b1p = prepared["wc"], prepared["b1"]
    w2t, b2p = prepared["w2t"], prepared["b2"]
    compute_dtype = prepared["compute_dtype"]
    Dp = wc.shape[1]
    out_dtype = x.dtype

    # Batch tile: multiple of 8 sublanes, large enough to amortize the
    # ~0.35 us per-grid-step overhead, but capped so the "parallel" batch
    # axis has >= 2 steps whenever N allows (both TensorCores busy on v7x).
    tb = _round_up(min(batch_tile, max(N, 8)), 8)
    if N > 8:
        tb = min(tb, _round_up(pl.cdiv(N, 2), 8))
    Np = _round_up(N, tb)

    xp = x.astype(compute_dtype)
    if Np != N:
        xp = jnp.pad(xp, ((0, Np - N), (0, 0)))

    grid = (Np // tb,)
    out = pl.pallas_call(
        _decoder_kernel,
        out_shape=jax.ShapeDtypeStruct((Np, D), out_dtype),
        grid_spec=pltpu.PrefetchScalarGridSpec(
            num_scalar_prefetch=0,
            grid=grid,
            in_specs=[
                pl.BlockSpec((tb, L), lambda i: (i, 0)),    # x tile
                pl.BlockSpec((L, Dp), lambda i: (0, 0)),    # folded Wc (resident)
                pl.BlockSpec((1, Dp), lambda i: (0, 0)),    # b1 (f32)
                pl.BlockSpec((Dp, Dp), lambda i: (0, 0)),   # W2^T (resident)
                pl.BlockSpec((1, Dp), lambda i: (0, 0)),    # b2 (f32)
            ],
            # Last block dim == full array dim (D) -> legal and unpadded store.
            out_specs=pl.BlockSpec((tb, D), lambda i: (i, 0)),
        ),
        compiler_params=pltpu.CompilerParams(
            dimension_semantics=("parallel",),
        ),
    )(xp, wc, b1p, w2t, b2p)
    return out if Np == N else out[:N]


def decoder_reference(x, w_mix, w1, b1, w2, b2):
    y = x @ jnp.abs(w_mix).T
    h = y @ w1.T + b1
    h = jnp.where(h > 0, h, 0.01 * h)
    return h @ w2.T + b2


if __name__ == "__main__":
    # Small shapes implied by the module: latent_dim -> observed_dim mixing.
    N, LATENT, OBSERVED = 16, 8, 32

    key = jax.random.PRNGKey(0)
    k_x, k_mix, k_w1, k_b1, k_w2, k_b2 = jax.random.split(key, 6)

    x = jax.random.normal(k_x, (N, LATENT), dtype=jnp.float32)

    # LinearPositive weight: torch.rand(observed_dim, latent_dim) -> U[0,1)
    w_mix = jax.random.uniform(k_mix, (OBSERVED, LATENT), dtype=jnp.float32)

    # MLP (observed_dim -> observed_dim -> observed_dim), Kaiming-ish scaling.
    w1 = jax.random.normal(k_w1, (OBSERVED, OBSERVED), dtype=jnp.float32) * (
        1.0 / jnp.sqrt(OBSERVED))
    b1 = jax.random.normal(k_b1, (OBSERVED,), dtype=jnp.float32) * 0.01
    w2 = jax.random.normal(k_w2, (OBSERVED, OBSERVED), dtype=jnp.float32) * (
        1.0 / jnp.sqrt(OBSERVED))
    b2 = jax.random.normal(k_b2, (OBSERVED,), dtype=jnp.float32) * 0.01

    ref = decoder_reference(x, w_mix, w1, b1, w2, b2)

    # f32 compute path: tight check against the reference.
    prep_f32 = jax.block_until_ready(
        prepare_decoder_weights(w_mix, w1, b1, w2, b2,
                                compute_dtype=jnp.float32))
    out_f32 = jax.block_until_ready(decoder_forward(x, prep_f32))
    assert out_f32.shape == (N, OBSERVED)
    assert jnp.allclose(out_f32, ref, atol=1e-4, rtol=1e-4), \
        "f32 kernel mismatch vs reference"

    # bf16 compute path (fast path): loose check against the f32 reference.
    prep_bf16 = jax.block_until_ready(
        prepare_decoder_weights(w_mix, w1, b1, w2, b2,
                                compute_dtype=jnp.bfloat16))
    out_bf16 = jax.block_until_ready(decoder_forward(x, prep_bf16))
    assert out_bf16.shape == (N, OBSERVED)
    assert jnp.allclose(out_bf16, ref, atol=5e-2, rtol=5e-2), \
        "bf16 kernel mismatch vs reference"

    print("KERNEL_OK")
</pallas_src>

<mosaic_0001>
module attributes {stable_mosaic.version = 11 : i64} {
  func.func @_decoder_kernel(%arg0: i32, %arg1: memref<8x8xf32, #tpu.memory_space<vmem>>, %arg2: memref<8x128xf32, #tpu.memory_space<vmem>>, %arg3: memref<1x128xf32, #tpu.memory_space<vmem>>, %arg4: memref<128x128xf32, #tpu.memory_space<vmem>>, %arg5: memref<1x128xf32, #tpu.memory_space<vmem>>, %arg6: memref<8x32xf32, #tpu.memory_space<vmem>>) attributes {dimension_semantics = [#tpu.dimension_semantics<parallel>], iteration_bounds = array<i64: 2>, scalar_prefetch = 0 : i64, scratch_operands = 0 : i64, tpu.core_type = #tpu.core_type<tc>, window_params = [{transform_indices = @transform_0, window_bounds = array<i64: 8, 8>}, {pipeline_mode = #tpu.pipeline_mode<synchronous>, transform_indices = @transform_1, window_bounds = array<i64: 8, 128>}, {pipeline_mode = #tpu.pipeline_mode<synchronous>, transform_indices = @transform_2, window_bounds = array<i64: 1, 128>}, {pipeline_mode = #tpu.pipeline_mode<synchronous>, transform_indices = @transform_3, window_bounds = array<i64: 128, 128>}, {pipeline_mode = #tpu.pipeline_mode<synchronous>, transform_indices = @transform_4, window_bounds = array<i64: 1, 128>}, {transform_indices = @transform_5, window_bounds = array<i64: 8, 32>}]} {
    %c0 = arith.constant 0 : index
    %c0_0 = arith.constant 0 : index
    %0 = vector.load %arg1[%c0, %c0_0] : memref<8x8xf32, #tpu.memory_space<vmem>>, vector<8x8xf32>
    %c0_1 = arith.constant 0 : index
    %c0_2 = arith.constant 0 : index
    %1 = vector.load %arg2[%c0_1, %c0_2] : memref<8x128xf32, #tpu.memory_space<vmem>>, vector<8x128xf32>
    %cst = arith.constant dense<0.000000e+00> : vector<8x128xf32>
    %2 = tpu.matmul %0, %1, %cst {dimension_numbers = #tpu.dot_dimension_numbers<[1], [0], [0], [1], [0, 0, 1, 1], [], []>} : vector<8x8xf32>, vector<8x128xf32>, vector<8x128xf32> -> vector<8x128xf32>
    %c0_3 = arith.constant 0 : index
    %c0_4 = arith.constant 0 : index
    %3 = vector.load %arg3[%c0_3, %c0_4] : memref<1x128xf32, #tpu.memory_space<vmem>>, vector<1x128xf32>
    %4 = vector.broadcast %3 : vector<1x128xf32> to vector<8x128xf32>
    %5 = arith.addf %2, %4 : vector<8x128xf32>
    %cst_5 = arith.constant 0.000000e+00 : f32
    %6 = vector.broadcast %cst_5 : f32 to vector<8x128xf32>
    %7 = arith.cmpf ogt, %5, %6 : vector<8x128xf32>
    %cst_6 = arith.constant 0.00999999977 : f32
    %8 = vector.broadcast %cst_6 : f32 to vector<8x128xf32>
    %9 = arith.mulf %8, %5 : vector<8x128xf32>
    %10 = arith.select %7, %5, %9 : vector<8x128xi1>, vector<8x128xf32>
    %c0_7 = arith.constant 0 : index
    %c0_8 = arith.constant 0 : index
    %11 = vector.load %arg4[%c0_7, %c0_8] : memref<128x128xf32, #tpu.memory_space<vmem>>, vector<128x128xf32>
    %cst_9 = arith.constant dense<0.000000e+00> : vector<8x128xf32>
    %12 = tpu.matmul %10, %11, %cst_9 {dimension_numbers = #tpu.dot_dimension_numbers<[1], [0], [0], [1], [0, 0, 1, 1], [], []>} : vector<8x128xf32>, vector<128x128xf32>, vector<8x128xf32> -> vector<8x128xf32>
    %c0_10 = arith.constant 0 : index
    %c0_11 = arith.constant 0 : index
    %13 = vector.load %arg5[%c0_10, %c0_11] : memref<1x128xf32, #tpu.memory_space<vmem>>, vector<1x128xf32>
    %14 = vector.broadcast %13 : vector<1x128xf32> to vector<8x128xf32>
    %15 = arith.addf %12, %14 : vector<8x128xf32>
    %16 = vector.extract_strided_slice %15 {offsets = [0, 0], sizes = [8, 32], strides = [1, 1]} : vector<8x128xf32> to vector<8x32xf32>
    %c0_12 = arith.constant 0 : index
    %c0_13 = arith.constant 0 : index
    %17 = vector.load %arg6[%c0_12, %c0_13] : memref<8x32xf32, #tpu.memory_space<vmem>>, vector<8x32xf32>
    tpu.vector_store %arg6[%c0_12, %c0_13], %16 {strides = array<i32>} : memref<8x32xf32, #tpu.memory_space<vmem>>, vector<8x32xf32>,
    return
  }
  func.func @transform_0(%arg0: i32) -> (i32, i32) {
    %c0_i32 = arith.constant 0 : i32
    %c0_i32_0 = arith.constant 0 : i32
    return %arg0, %c0_i32 : i32, i32
  }
  func.func @transform_1(%arg0: i32) -> (i32, i32) {
    %c0_i32 = arith.constant 0 : i32
    %c0_i32_0 = arith.constant 0 : i32
    %c0_i32_1 = arith.constant 0 : i32
    return %c0_i32, %c0_i32_0 : i32, i32
  }
  func.func @transform_2(%arg0: i32) -> (i32, i32) {
    %c0_i32 = arith.constant 0 : i32
    %c0_i32_0 = arith.constant 0 : i32
    %c0_i32_1 = arith.constant 0 : i32
    return %c0_i32, %c0_i32_0 : i32, i32
  }
  func.func @transform_3(%arg0: i32) -> (i32, i32) {
    %c0_i32 = arith.constant 0 : i32
    %c0_i32_0 = arith.constant 0 : i32
    %c0_i32_1 = arith.constant 0 : i32
    return %c0_i32, %c0_i32_0 : i32, i32
  }
  func.func @transform_4(%arg0: i32) -> (i32, i32) {
    %c0_i32 = arith.constant 0 : i32
    %c0_i32_0 = arith.constant 0 : i32
    %c0_i32_1 = arith.constant 0 : i32
    return %c0_i32, %c0_i32_0 : i32, i32
  }
  func.func @transform_5(%arg0: i32) -> (i32, i32) {
    %c0_i32 = arith.constant 0 : i32
    %c0_i32_0 = arith.constant 0 : i32
    return %arg0, %c0_i32 : i32, i32
  }
}

</mosaic_0001>

<llo_original>
// kernel: tpu_custom_call.1
$region0: #{tpu_custom_call.1}
  #allocation0 [shape = 'u32[]', space=smem, size = 0x4, offset = 0x4, fixed_abs, tag = 'smem constant byte address 0x4 - core index']
  #allocation1 [shape = 'u32[144,128]{1,0:T(1,128)}', space=vmem, size = 0x12000, scoped, tag = 'internal scratch']
  %s0 = inlined_call_operand.vmem [shape: f32[16,8], index: 0, kind: input, shape index: {}]
  %s1 = inlined_call_operand.vmem [shape: f32[8,128], index: 1, kind: input, shape index: {}]
  %s2 = inlined_call_operand.vmem [shape: f32[1,128], index: 2, kind: input, shape index: {}]
  %s3 = inlined_call_operand.hbm [shape: f32[128,128], index: 3, kind: input, shape index: {}]
  %s4 = inlined_call_operand.vmem [shape: f32[1,128], index: 4, kind: input, shape index: {}]
  %s5 = inlined_call_operand.hbm [shape: f32[16,32], index: 5, kind: output, shape index: {}]
  %s6 = sld [smem:[#allocation0]]
  $region57: #{tpu_custom_call.1} parent=0
    _
  %s8 = ssub.s32 1, %s6
  %s9 = scalar_select 0, %s8, %s6
  $region1: #{tpu_custom_call.1} parent=0
    #allocation2 [shape = 'u8[65536]{0}', space=vmem, size = 0x10000, scoped, tag = 'input window, operand 3, single buffered']
    #allocation3 [shape = 's32[2]{0}', space=sflag, size = 0x8, scoped, tag = 'scoped memory for tpu_custom_call.1']
    #allocation4 [shape = 's32[2]{0}', space=sflag, size = 0x8, scoped, tag = 'scoped memory for tpu_custom_call.1']
    #allocation5 [shape = 'u8[8192]{0}', space=vmem, size = 0x2000, scoped, tag = 'output window, operand 0']
    %10 = vsyncpa [#allocation3], 0
    %11 = vsyncpa [#allocation4], 0
    %s12 = scalar_lea.sflag [#allocation4], 1
    %13 = vsyncpa %s12, 0
    loop: start=0, step=1, limit=4
    $region2: #{tpu_custom_call.1} parent=1 // loop_pre_header
      _
    $region3: #{tpu_custom_call.1} parent=1 // loop_header
      %s15 = sphi 0, %s19
      %p16 = scmp.ge.s32.totalorder %s15, 4
      %s25 = sphi 0, %s27
      %s28 = sphi 0, %s25
      %s29 = sphi 0, %s28
      %s45 = sphi 0, %s29
      %s49 = sphi 0, %s49
      %s51 = sphi 0, %s49
      %s52 = sphi 0, %s51
      %s66 = sphi 0, %s52
      %s70 = sphi 0, %s70
      %s72 = sphi 0, %s70
      %s73 = sphi 0, %s72
      %s87 = sphi 0, %s73
      %s91 = sphi 0, %s91
      %s93 = sphi 0, %s91
      %s94 = sphi 0, %s93
      %s108 = sphi 0, %s94
      %s112 = sphi 0, %s112
      %s114 = sphi 0, %s112
      %s115 = sphi 0, %s114
      %s129 = sphi 0, %s115
      %s135 = sphi 0, %s137
      %s138 = sphi 0, %s135
      %s139 = sphi 0, %s138
      %s155 = sphi 0, %s139
    $region4: #{tpu_custom_call.1} parent=1 // loop_header_branch
      %18 = sbr.rel (%p16) target = $region8
    $region5: #{tpu_custom_call.1} parent=1 // loop_body
      %s20 = ssub.s32 %s15, 1
      %s21 = ssub.s32 %s15, 2
      %s22 = sadd.s32 %s15, 1
      %s23 = ssub.s32 %s15, %s22
      %p24 = scmp.eq.s32.totalorder %s23, 0
      %s26 = sadd.s32 %s25, 1
      %s27 = scalar_select %p24, %s25, %s26
      %p30 = pneg %p24
      %p31 = scmp.eq.s32.totalorder %s15, 1
      %p32 = por %p30, %p31
      %p33 = scmp.ne.s32.totalorder %s25, %s28
      %p34 = scmp.eq.s32.totalorder %s15, 0
      %p35 = por %p33, %p34
      %p36 = scmp.ne.s32.totalorder %s25, %s28
      %p37 = scmp.eq.s32.totalorder %s20, 1
      %p38 = por %p36, %p37
      %p39 = scmp.ne.s32.totalorder %s28, %s29
      %p40 = scmp.eq.s32.totalorder %s20, 0
      %p41 = por %p39, %p40
      %p42 = scmp.ne.s32.totalorder %s28, %s29
      %p43 = scmp.eq.s32.totalorder %s21, 1
      %p44 = por %p42, %p43
      %p46 = scmp.ne.s32.totalorder %s29, %s45
      %p47 = scmp.eq.s32.totalorder %s21, 0
      %p48 = por %p46, %p47
      %s50 = sadd.s32 %s49, 1
      %p53 = scmp.eq.s32.totalorder %s15, 1
      %p54 = scmp.ne.s32.totalorder %s49, %s51
      %p55 = scmp.eq.s32.totalorder %s15, 0
      %p56 = por %p54, %p55
      %p57 = scmp.ne.s32.totalorder %s49, %s51
      %p58 = scmp.eq.s32.totalorder %s20, 1
      %p59 = por %p57, %p58
      %p60 = scmp.ne.s32.totalorder %s51, %s52
      %p61 = scmp.eq.s32.totalorder %s20, 0
      %p62 = por %p60, %p61
      %p63 = scmp.ne.s32.totalorder %s51, %s52
      %p64 = scmp.eq.s32.totalorder %s21, 1
      %p65 = por %p63, %p64
      %p67 = scmp.ne.s32.totalorder %s52, %s66
      %p68 = scmp.eq.s32.totalorder %s21, 0
      %p69 = por %p67, %p68
      %s71 = sadd.s32 %s70, 1
      %p74 = scmp.eq.s32.totalorder %s15, 1
      %p75 = scmp.ne.s32.totalorder %s70, %s72
      %p76 = scmp.eq.s32.totalorder %s15, 0
      %p77 = por %p75, %p76
      %p78 = scmp.ne.s32.totalorder %s70, %s72
      %p79 = scmp.eq.s32.totalorder %s20, 1
      %p80 = por %p78, %p79
      %p81 = scmp.ne.s32.totalorder %s72, %s73
      %p82 = scmp.eq.s32.totalorder %s20, 0
      %p83 = por %p81, %p82
      %p84 = scmp.ne.s32.totalorder %s72, %s73
      %p85 = scmp.eq.s32.totalorder %s21, 1
      %p86 = por %p84, %p85
      %p88 = scmp.ne.s32.totalorder %s73, %s87
      %p89 = scmp.eq.s32.totalorder %s21, 0
      %p90 = por %p88, %p89
      %s92 = sadd.s32 %s91, 1
      %p95 = scmp.eq.s32.totalorder %s15, 1
      %p96 = scmp.ne.s32.totalorder %s91, %s93
      %p97 = scmp.eq.s32.totalorder %s15, 0
      %p98 = por %p96, %p97
      %p99 = scmp.ne.s32.totalorder %s91, %s93
      %p100 = scmp.eq.s32.totalorder %s20, 1
      %p101 = por %p99, %p100
      %p102 = scmp.ne.s32.totalorder %s93, %s94
      %p103 = scmp.eq.s32.totalorder %s20, 0
      %p104 = por %p102, %p103
      %p105 = scmp.ne.s32.totalorder %s93, %s94
      %p106 = scmp.eq.s32.totalorder %s21, 1
      %p107 = por %p105, %p106
      %p109 = scmp.ne.s32.totalorder %s94, %s108
      %p110 = scmp.eq.s32.totalorder %s21, 0
      %p111 = por %p109, %p110
      %s113 = sadd.s32 %s112, 1
      %p116 = scmp.eq.s32.totalorder %s15, 1
      %p117 = scmp.ne.s32.totalorder %s112, %s114
      %p118 = scmp.eq.s32.totalorder %s15, 0
      %p119 = por %p117, %p118
      %p120 = scmp.ne.s32.totalorder %s112, %s114
      %p121 = scmp.eq.s32.totalorder %s20, 1
      %p122 = por %p120, %p121
      %p123 = scmp.ne.s32.totalorder %s114, %s115
      %p124 = scmp.eq.s32.totalorder %s20, 0
      %p125 = por %p123, %p124
      %p126 = scmp.ne.s32.totalorder %s114, %s115
      %p127 = scmp.eq.s32.totalorder %s21, 1
      %p128 = por %p126, %p127
      %p130 = scmp.ne.s32.totalorder %s115, %s129
      %p131 = scmp.eq.s32.totalorder %s21, 0
      %p132 = por %p130, %p131
      %s133 = ssub.s32 %s15, %s22
      %p134 = scmp.eq.s32.totalorder %s133, 0
      %s136 = sadd.s32 %s135, 1
      %s137 = scalar_select %p134, %s135, %s136
      %p140 = pneg %p134
      %p141 = scmp.eq.s32.totalorder %s15, 1
      %p142 = por %p140, %p141
      %p143 = scmp.ne.s32.totalorder %s135, %s138
      %p144 = scmp.eq.s32.totalorder %s15, 0
      %p145 = por %p143, %p144
      %p146 = scmp.ne.s32.totalorder %s135, %s138
      %p147 = scmp.eq.s32.totalorder %s20, 1
      %p148 = por %p146, %p147
      %p149 = scmp.ne.s32.totalorder %s138, %s139
      %p150 = scmp.eq.s32.totalorder %s20, 0
      %p151 = por %p149, %p150
      %p152 = scmp.ne.s32.totalorder %s138, %s139
      %p153 = scmp.eq.s32.totalorder %s21, 1
      %p154 = por %p152, %p153
      %p156 = scmp.ne.s32.totalorder %s139, %s155
      %p157 = scmp.eq.s32.totalorder %s21, 0
      %p158 = por %p156, %p157
      %p159 = scmp.le.s32.totalorder 1, %s15
      %p160 = scmp.lt.s32.totalorder %s15, 3
      %p161 = pnand %p159, %p160
      %p162 = pneg %p161
      // Predicated region
      $region9: #{tpu_custom_call.1} parent=5 // pred_check
        _
      $region10: #{tpu_custom_call.1} parent=5 // pred_check_branch
        %164 = sbr.rel (%p161) target = $region12
      $region11: #{tpu_custom_call.1} parent=5 // pred_region
        %s165 = ssub.s32 %s15, 1
        // Predicated region
        $region13: #{tpu_custom_call.1} parent=11 // pred_check
          %p166 = pneg %p62
        $region14: #{tpu_custom_call.1} parent=11 // pred_check_branch
          %168 = sbr.rel (%p166) target = $region16
        $region15: #{tpu_custom_call.1} parent=11 // pred_region
          _
        $region16: #{tpu_custom_call.1} parent=11 // pred_fallthru
          _
        // Predicated region
        $region17: #{tpu_custom_call.1} parent=11 // pred_check
          %p169 = pneg %p83
        $region18: #{tpu_custom_call.1} parent=11 // pred_check_branch
          %171 = sbr.rel (%p169) target = $region20
        $region19: #{tpu_custom_call.1} parent=11 // pred_region
          _
        $region20: #{tpu_custom_call.1} parent=11 // pred_fallthru
          _
        // Predicated region
        $region21: #{tpu_custom_call.1} parent=11 // pred_check
          %p172 = pneg %p104
        $region22: #{tpu_custom_call.1} parent=11 // pred_check_branch
          %174 = sbr.rel (%p172) target = $region24
        $region23: #{tpu_custom_call.1} parent=11 // pred_region
          %s176 = ssub.s32 2048, 2048
          %177 = vsyncadd [#allocation3], %s176
          %s178 = sshll.u32 [#allocation2], 4
          %s179 = int_to_ptr.vmem [resolvable:$true] %s178
          %184 = dma.hbm_to_vmem [thread:$0]  %s3, 2048, %s179, [#allocation3], 128, 128, 8
        $region24: #{tpu_custom_call.1} parent=11 // pred_fallthru
          _
        // Predicated region
        $region25: #{tpu_custom_call.1} parent=11 // pred_check
          %p185 = pneg %p125
        $region26: #{tpu_custom_call.1} parent=11 // pred_check_branch
          %187 = sbr.rel (%p185) target = $region28
        $region27: #{tpu_custom_call.1} parent=11 // pred_region
          _
        $region28: #{tpu_custom_call.1} parent=11 // pred_fallthru
          _
      $region12: #{tpu_custom_call.1} parent=5 // pred_fallthru
        _
      %p188 = scmp.lt.s32.totalorder %s15, 2
      // Predicated region
      $region29: #{tpu_custom_call.1} parent=5 // pred_check
        %p189 = pneg %p188
      $region30: #{tpu_custom_call.1} parent=5 // pred_check_branch
        %191 = sbr.rel (%p189) target = $region32
      $region31: #{tpu_custom_call.1} parent=5 // pred_region
        // Predicated region
        $region33: #{tpu_custom_call.1} parent=31 // pred_check
          %p192 = pneg %p35
        $region34: #{tpu_custom_call.1} parent=31 // pred_check_branch
          %194 = sbr.rel (%p192) target = $region36
        $region35: #{tpu_custom_call.1} parent=31 // pred_region
          %p195 = scmp.lt.s32.totalorder %s15, 1
          %s196 = scalar_select %p195, %s15, 1
          %s197 = smul.addr %s196, 8
          %s198 = scalar_lea.vmem %s0, %s197
        $region36: #{tpu_custom_call.1} parent=31 // pred_fallthru
          _
      $region32: #{tpu_custom_call.1} parent=5 // pred_fallthru
        _
      %p199 = scmp.le.s32.totalorder 1, %s15
      %p200 = scmp.lt.s32.totalorder %s15, 3
      %p201 = pnand %p199, %p200
      %p202 = pneg %p201
      // Predicated region
      $region37: #{tpu_custom_call.1} parent=5 // pred_check
        _
      $region38: #{tpu_custom_call.1} parent=5 // pred_check_branch
        %204 = sbr.rel (%p201) target = $region40
      $region39: #{tpu_custom_call.1} parent=5 // pred_region
        %s205 = ssub.s32 %s15, 1
        // Predicated region
        $region41: #{tpu_custom_call.1} parent=39 // pred_check
          %p206 = pneg %p104
        $region42: #{tpu_custom_call.1} parent=39 // pred_check_branch
          %208 = sbr.rel (%p206) target = $region44
        $region43: #{tpu_custom_call.1} parent=39 // pred_region
          %209 = dma.done [#allocation3], 2048
        $region44: #{tpu_custom_call.1} parent=39 // pred_fallthru
          _
        %p210 = scmp.lt.s32.totalorder %s20, 1
        %s211 = scalar_select %p210, %s20, 1
        %s212 = smul.addr %s211, 8
        %s213 = scalar_lea.vmem %s0, %s212
        %p214 = pneg %p41
        %p215 = pneg %p38
        %p216 = pneg %p62
        %p217 = pneg %p59
        %p218 = pneg %p83
        %p219 = pneg %p80
        %p220 = pneg %p104
        %p221 = pneg %p101
        %p222 = pneg %p125
        %p223 = pneg %p122
        %p224 = pneg %p151
        %p225 = pneg %p148
        %s226 = sand.u32 %s138, 1
        %s227 = scalar_lea.sflag [#allocation4], %s226
        %s228 = sand.u32 %s138, 1
        %s229 = smul.addr %s228, 8
        %s230 = scalar_lea.vmem [#allocation5], %s229
        %p231 = scmp.lt.s32.totalorder %s20, 1
        %s232 = scalar_select %p231, %s20, 1
        %s233 = smul.addr %s232, 8
        %s234 = scalar_lea.vmem %s0, %s233
        %v235 = vld [vmem:[%s234] sm:$0xff]
        %v236 = vld [vmem:[%s1] sm:$0xff]
        %v237 = vld [vmem:[%s2] sm:$0x1]
        %v239 = vlaneseq
        %v240 = vshrl.u32 %v239, 7
        %v241 = vsub.s32 0, %v240
        %v242 = vrot.slane %v237, %v241
        %vm244 = vcmask 64512
        %v246 = vsel %vm244, %v235, 0
        %248 = vmatprep.subr.mxu0 0.0
        %249 = vmatpush1.msra.mxu0 0.0
        %250 = vmatprep.subr.mxu0 0.0
        %251 = vmatpush1.msra.mxu0 0.0
        %252 = vmatprep.subr.mxu0 0.0
        %253 = vmatpush1.msra.mxu0 0.0
        %254 = vmatprep.subr.mxu0 0.0
        %255 = vmatpush1.msra.mxu0 0.0
        %256 = vmatprep.subr.mxu0 0.0
        %257 = vmatpush1.msra.mxu0 0.0
        %258 = vmatprep.subr.mxu0 0.0
        %259 = vmatpush1.msra.mxu0 0.0
        %260 = vmatprep.subr.mxu0 0.0
        %261 = vmatpush1.msra.mxu0 0.0
        %262 = vmatprep.subr.mxu0 0.0
        %263 = vmatpush1.msra.mxu0 0.0
        %264 = vmatprep.subr.mxu0 0.0
        %265 = vmatpush1.msra.mxu0 0.0
        %266 = vmatprep.subr.mxu0 0.0
        %267 = vmatpush1.msra.mxu0 0.0
        %268 = vmatprep.subr.mxu0 0.0
        %269 = vmatpush1.msra.mxu0 0.0
        %270 = vmatprep.subr.mxu0 0.0
        %271 = vmatpush1.msra.mxu0 0.0
        %272 = vmatprep.subr.mxu0 0.0
        %273 = vmatpush1.msra.mxu0 0.0
        %274 = vmatprep.subr.mxu0 0.0
        %275 = vmatpush1.msra.mxu0 0.0
        %276 = vmatprep.subr.mxu0 0.0
        %277 = vmatpush1.msra.mxu0 0.0
        %278 = vmatprep.subr.mxu0 0.0
        %279 = vmatpush1.msra.mxu0 %v236
        %280 = vmatprep.subr.mxu0 0.0
        %281 = vmatpush2.msra.mxu0 0.0
        %282 = vmatprep.subr.mxu0 0.0
        %283 = vmatpush2.msra.mxu0 0.0
        %284 = vmatprep.subr.mxu0 0.0
        %285 = vmatpush2.msra.mxu0 0.0
        %286 = vmatprep.subr.mxu0 0.0
        %287 = vmatpush2.msra.mxu0 0.0
        %288 = vmatprep.subr.mxu0 0.0
        %289 = vmatpush2.msra.mxu0 0.0
        %290 = vmatprep.subr.mxu0 0.0
        %291 = vmatpush2.msra.mxu0 0.0
        %292 = vmatprep.subr.mxu0 0.0
        %293 = vmatpush2.msra.mxu0 0.0
        %294 = vmatprep.subr.mxu0 0.0
        %295 = vmatpush2.msra.mxu0 0.0
        %296 = vmatprep.subr.mxu0 0.0
        %297 = vmatpush2.msra.mxu0 0.0
        %298 = vmatprep.subr.mxu0 0.0
        %299 = vmatpush2.msra.mxu0 0.0
        %300 = vmatprep.subr.mxu0 0.0
        %301 = vmatpush2.msra.mxu0 0.0
        %302 = vmatprep.subr.mxu0 0.0
        %303 = vmatpush2.msra.mxu0 0.0
        %304 = vmatprep.subr.mxu0 0.0
        %305 = vmatpush2.msra.mxu0 0.0
        %306 = vmatprep.subr.mxu0 0.0
        %307 = vmatpush2.msra.mxu0 0.0
        %308 = vmatprep.subr.mxu0 0.0
        %309 = vmatpush2.msra.mxu0 0.0
        %310 = vmatprep.subr.mxu0 0.0
        %311 = vmatpush2.msra.mxu0 0.0
        %312 = vmatprep.mubr.f32.mxu0 0.0
        %313 = vmatmul.mubr.f32.gmra.mxu0 %v246
        %v314 = vpop.f32.mrf.mxu0
        %v315 = vadd.f32 %v242, %v314
        %v316 = vpop.f32.mrf.mxu0
        %317 = vdwg.mxu0
        %vm318 = vcmp.gt.f32.partialorder %v315, 0.0
        %v319 = vmul.f32 %v315, 0.01
        %v320 = vsel %vm318, %v315, %v319
        %v321 = vld [vmem:[#allocation2] sm:$0xff]
        %v322 = vld [vmem:[#allocation2 + $0x8] sm:$0xff]
        %v323 = vld [vmem:[#allocation2 + $0x10] sm:$0xff]
        %v324 = vld [vmem:[#allocation2 + $0x18] sm:$0xff]
        %v325 = vld [vmem:[#allocation2 + $0x20] sm:$0xff]
        %v326 = vld [vmem:[#allocation2 + $0x28] sm:$0xff]
        %v327 = vld [vmem:[#allocation2 + $0x30] sm:$0xff]
        %v328 = vld [vmem:[#allocation2 + $0x38] sm:$0xff]
        %v329 = vld [vmem:[#allocation2 + $0x40] sm:$0xff]
        %v330 = vld [vmem:[#allocation2 + $0x48] sm:$0xff]
        %v331 = vld [vmem:[#allocation2 + $0x50] sm:$0xff]
        %v332 = vld [vmem:[#allocation2 + $0x58] sm:$0xff]
        %v333 = vld [vmem:[#allocation2 + $0x60] sm:$0xff]
        %v334 = vld [vmem:[#allocation2 + $0x68] sm:$0xff]
        %v335 = vld [vmem:[#allocation2 + $0x70] sm:$0xff]
        %v336 = vld [vmem:[#allocation2 + $0x78] sm:$0xff]
        %v337 = vld [vmem:[%s4] sm:$0x1]
        %v339 = vlaneseq
        %v340 = vshrl.u32 %v339, 7
        %v341 = vsub.s32 0, %v340
        %v342 = vrot.slane %v337, %v341
        %344 = vmatprep.subr.mxu0 0.0
        %345 = vmatpush1.msra.mxu0 %v336
        %346 = vmatprep.subr.mxu0 0.0
        %347 = vmatpush1.msra.mxu0 %v335
        %348 = vmatprep.subr.mxu0 0.0
        %349 = vmatpush1.msra.mxu0 %v334
        %350 = vmatprep.subr.mxu0 0.0
        %351 = vmatpush1.msra.mxu0 %v333
        %352 = vmatprep.subr.mxu0 0.0
        %353 = vmatpush1.msra.mxu0 %v332
        %354 = vmatprep.subr.mxu0 0.0
        %355 = vmatpush1.msra.mxu0 %v331
        %356 = vmatprep.subr.mxu0 0.0
        %357 = vmatpush1.msra.mxu0 %v330
        %358 = vmatprep.subr.mxu0 0.0
        %359 = vmatpush1.msra.mxu0 %v329
        %360 = vmatprep.subr.mxu0 0.0
        %361 = vmatpush1.msra.mxu0 %v328
        %362 = vmatprep.subr.mxu0 0.0
        %363 = vmatpush1.msra.mxu0 %v327
        %364 = vmatprep.subr.mxu0 0.0
        %365 = vmatpush1.msra.mxu0 %v326
        %366 = vmatprep.subr.mxu0 0.0
        %367 = vmatpush1.msra.mxu0 %v325
        %368 = vmatprep.subr.mxu0 0.0
        %369 = vmatpush1.msra.mxu0 %v324
        %370 = vmatprep.subr.mxu0 0.0
        %371 = vmatpush1.msra.mxu0 %v323
        %372 = vmatprep.subr.mxu0 0.0
        %373 = vmatpush1.msra.mxu0 %v322
        %374 = vmatprep.subr.mxu0 0.0
        %375 = vmatpush1.msra.mxu0 %v321
        %376 = vmatprep.subr.mxu0 0.0
        %377 = vmatpush2.msra.mxu0 0.0
        %378 = vmatprep.subr.mxu0 0.0
        %379 = vmatpush2.msra.mxu0 0.0
        %380 = vmatprep.subr.mxu0 0.0
        %381 = vmatpush2.msra.mxu0 0.0
        %382 = vmatprep.subr.mxu0 0.0
        %383 = vmatpush2.msra.mxu0 0.0
        %384 = vmatprep.subr.mxu0 0.0
        %385 = vmatpush2.msra.mxu0 0.0
        %386 = vmatprep.subr.mxu0 0.0
        %387 = vmatpush2.msra.mxu0 0.0
        %388 = vmatprep.subr.mxu0 0.0
        %389 = vmatpush2.msra.mxu0 0.0
        %390 = vmatprep.subr.mxu0 0.0
        %391 = vmatpush2.msra.mxu0 0.0
        %392 = vmatprep.subr.mxu0 0.0
        %393 = vmatpush2.msra.mxu0 0.0
        %394 = vmatprep.subr.mxu0 0.0
        %395 = vmatpush2.msra.mxu0 0.0
        %396 = vmatprep.subr.mxu0 0.0
        %397 = vmatpush2.msra.mxu0 0.0
        %398 = vmatprep.subr.mxu0 0.0
        %399 = vmatpush2.msra.mxu0 0.0
        %400 = vmatprep.subr.mxu0 0.0
        %401 = vmatpush2.msra.mxu0 0.0
        %402 = vmatprep.subr.mxu0 0.0
        %403 = vmatpush2.msra.mxu0 0.0
        %404 = vmatprep.subr.mxu0 0.0
        %405 = vmatpush2.msra.mxu0 0.0
        %406 = vmatprep.subr.mxu0 0.0
        %407 = vmatpush2.msra.mxu0 0.0
        %408 = vmatprep.mubr.f32.mxu0 0.0
        %409 = vmatmul.mubr.f32.gmra.mxu0 %v320
        %v410 = vpop.f32.mrf.mxu0
        %v411 = vadd.f32 %v342, %v410
        %v412 = vpop.f32.mrf.mxu0
        %413 = vdwg.mxu0
        %vm414 = vcmask 261120
        %415 = vst.msk [vmem:[%s230] sm:$0xff] %vm414, %v411
        %s416 = sand.u32 %s138, 1
        %s417 = scalar_lea.sflag [#allocation4], %s416
        %s418 = sand.u32 %s138, 1
        %s419 = smul.addr %s418, 8
        %s420 = scalar_lea.vmem [#allocation5], %s419
        // Predicated region
        $region45: #{tpu_custom_call.1} parent=39 // pred_check
          %p421 = pneg %p148
        $region46: #{tpu_custom_call.1} parent=39 // pred_check_branch
          %423 = sbr.rel (%p421) target = $region48
        $region47: #{tpu_custom_call.1} parent=39 // pred_region
          %s425 = ssub.s32 128, 128
          %426 = vsyncadd %s417, %s425
          %s427 = smul.addr %s20, 128
          %s428 = scalar_lea.hbm %s5, %s427
          %s430 = sshll.u32 %s420, 4
          %s431 = int_to_ptr.vmem [resolvable:$true] %s430
          %433 = dma.vmem_to_hbm [thread:$0]  %s431, 128, %s428, %s417
        $region48: #{tpu_custom_call.1} parent=39 // pred_fallthru
          _
      $region40: #{tpu_custom_call.1} parent=5 // pred_fallthru
        _
      %p434 = scmp.le.s32.totalorder 2, %s15
      // Predicated region
      $region49: #{tpu_custom_call.1} parent=5 // pred_check
        %p435 = pneg %p434
      $region50: #{tpu_custom_call.1} parent=5 // pred_check_branch
        %437 = sbr.rel (%p435) target = $region52
      $region51: #{tpu_custom_call.1} parent=5 // pred_region
        %s438 = ssub.s32 %s15, 2
        // Predicated region
        $region53: #{tpu_custom_call.1} parent=51 // pred_check
          %p439 = pneg %p154
        $region54: #{tpu_custom_call.1} parent=51 // pred_check_branch
          %441 = sbr.rel (%p439) target = $region56
        $region55: #{tpu_custom_call.1} parent=51 // pred_region
          %s442 = sand.u32 %s139, 1
          %s443 = scalar_lea.sflag [#allocation4], %s442
          %s444 = sand.u32 %s139, 1
          %s445 = smul.addr %s444, 8
          %s446 = scalar_lea.vmem [#allocation5], %s445
          %447 = dma.done %s443, 128
        $region56: #{tpu_custom_call.1} parent=51 // pred_fallthru
          _
      $region52: #{tpu_custom_call.1} parent=5 // pred_fallthru
        _
    $region6: #{tpu_custom_call.1} parent=1 // loop_footer
      %s19 = sadd.s32 1, %s15
    $region7: #{tpu_custom_call.1} parent=1 // loop_footer_branch
      %14 = sbr.rel target = $region3
    $region8: #{tpu_custom_call.1} parent=1 // loop_exit
      _
    %448 = vsyncpa [#allocation3], 1
    %s449 = scalar_lea.sflag [#allocation3], 1
    %450 = vsyncpa %s449, 1
    %451 = vsyncpa [#allocation4], 1
    %s452 = scalar_lea.sflag [#allocation4], 1
    %453 = vsyncpa %s452, 1

</llo_original>
